<compile_context>
chip_gen: v5e
topology: v5e:2x2
jax: 0.10.0
libtpu: 0.0.40
codegen_flags: <defaults>
</compile_context>

<pallas_src>
import functools

import jax
import jax.numpy as jnp
from jax.experimental import pallas as pl
from jax.experimental.pallas import tpu as pltpu


def _round_up(v, m):
    return ((v + m - 1) // m) * m


_VMEM_TILE_BUDGET = 24 * 1024 * 1024   # double-buffered tile budget (bytes)
_VMEM_LIMIT_BYTES = 32 * 1024 * 1024   # scoped VMEM limit requested


def _choose_tiles(B, D_pad, K, in_bytes, out_bytes):
    """Pick (tm, tk, tn) under the cross-generation VMEM budget."""
    # Batch tile.
    if B < 128:
        tm = _round_up(B, 8)
    else:
        tm = 512 if B >= 512 else (256 if B >= 256 else 128)
    # Reduction tile: must divide the zero-padded D exactly.
    tk = max(c for c in (512, 256, 128) if D_pad % c == 0)

    def fits(tm_, tk_, tn_):
        need = 2 * (tm_ * tk_ * in_bytes + tk_ * tn_ * in_bytes
                    + tm_ * tn_ * out_bytes)
        return need <= _VMEM_TILE_BUDGET

    # Output-lane tile: as large as the budget allows (lane-dense writeback).
    if K < 128:
        tn = K                      # full minor dim (allowed by layout rules)
    else:
        tn = 128
        k_ceil = _round_up(K, 128)
        for cand in (1024, 512, 256, 128):
            if cand <= k_ceil and fits(tm, tk, cand):
                tn = cand
                break
    while not fits(tm, tk, tn) and tm > 8:   # safety net
        tm //= 2
    return tm, tk, tn


def _mm_kernel_single_k(x_ref, w_ref, o_ref):
    # Whole reduction in one block: direct store, no scratch, no extra copy.
    o_ref[...] = jnp.dot(
        x_ref[...], w_ref[...], preferred_element_type=jnp.float32
    ).astype(o_ref.dtype)


def _mm_kernel_multi_k(x_ref, w_ref, o_ref):
    # Output block is resident across the (innermost) reduction axis:
    # accumulate directly into the f32 output, no separate VMEM scratch.
    part = jnp.dot(x_ref[...], w_ref[...], preferred_element_type=jnp.float32)

    @pl.when(pl.program_id(2) == 0)
    def _():
        o_ref[...] = part

    @pl.when(pl.program_id(2) > 0)
    def _():
        o_ref[...] += part


def _head_matmul(x_p, w_t, compute_dtype):
    """x_p: [B, D_pad], w_t: [D_pad, K] (compute dtype) -> [B, K] float32."""
    B, D_pad = x_p.shape
    _, K = w_t.shape
    in_bytes = jnp.dtype(compute_dtype).itemsize
    tm, tk, tn = _choose_tiles(B, D_pad, K, in_bytes, 4)
    gm, gn, gk = pl.cdiv(B, tm), pl.cdiv(K, tn), D_pad // tk

    cost = pl.CostEstimate(
        flops=2 * B * D_pad * K,
        transcendentals=0,
        bytes_accessed=B * D_pad * in_bytes + D_pad * K * in_bytes + B * K * 4,
    )

    if gk == 1:
        cp = pltpu.CompilerParams(
            dimension_semantics=("parallel", "parallel"),
            vmem_limit_bytes=_VMEM_LIMIT_BYTES,
        )
        return pl.pallas_call(
            _mm_kernel_single_k,
            out_shape=jax.ShapeDtypeStruct((B, K), jnp.float32),
            grid=(gm, gn),
            in_specs=[
                pl.BlockSpec((tm, D_pad), lambda i, j: (i, 0)),
                pl.BlockSpec((D_pad, tn), lambda i, j: (0, j)),
            ],
            out_specs=pl.BlockSpec((tm, tn), lambda i, j: (i, j)),
            compiler_params=cp,
            cost_estimate=cost,
        )(x_p, w_t)

    cp = pltpu.CompilerParams(
        dimension_semantics=("parallel", "parallel", "arbitrary"),
        vmem_limit_bytes=_VMEM_LIMIT_BYTES,
    )
    return pl.pallas_call(
        _mm_kernel_multi_k,
        out_shape=jax.ShapeDtypeStruct((B, K), jnp.float32),
        grid=(gm, gn, gk),
        in_specs=[
            pl.BlockSpec((tm, tk), lambda i, j, k: (i, k)),
            pl.BlockSpec((tk, tn), lambda i, j, k: (k, j)),
        ],
        out_specs=pl.BlockSpec((tm, tn), lambda i, j, k: (i, j)),
        compiler_params=cp,
        cost_estimate=cost,
    )(x_p, w_t)


@functools.partial(jax.jit, static_argnames=("d_pad", "compute_dtype"))
def _multi_proto_forward(x, w_heads_t, *, d_pad, compute_dtype):
    """x: [B, D] -> tuple of per-head outputs [B, k_i] (float32)."""
    B, D = x.shape
    x_c = x.astype(compute_dtype)
    if d_pad != D:
        # Zero-pad only the contraction dim (exact); done once, shared by heads.
        x_c = jnp.pad(x_c, ((0, 0), (0, d_pad - D)))
    return tuple(_head_matmul(x_c, w_t, compute_dtype) for w_t in w_heads_t)


class MultiPrototypes:
    """JAX/Pallas re-implementation of the PyTorch MultiPrototypes module."""

    def __init__(self, output_dim, nmb_prototypes, key,
                 compute_dtype=jnp.bfloat16):
        self.nmb_heads = len(nmb_prototypes)
        self.head_sizes = tuple(int(k) for k in nmb_prototypes)
        self.output_dim = int(output_dim)
        self.compute_dtype = jnp.dtype(compute_dtype)
        self.d_pad = _round_up(self.output_dim, 128)

        keys = jax.random.split(key, self.nmb_heads)
        bound = 1.0 / float(output_dim) ** 0.5
        # PyTorch-convention master weights [k_i, D] in float32.
        self.weights = [
            jax.random.uniform(sk, (k, output_dim), dtype=jnp.float32,
                               minval=-bound, maxval=bound)
            for k, sk in zip(self.head_sizes, keys)
        ]
        # Pre-transposed, D-zero-padded, compute-dtype slabs [D_pad, k_i],
        # built once at init.
        self.w_heads_t = tuple(
            jnp.pad(w.T.astype(self.compute_dtype),
                    ((0, self.d_pad - self.output_dim), (0, 0)))
            for w in self.weights
        )

    def __call__(self, x):
        return list(_multi_proto_forward(
            x, self.w_heads_t, d_pad=self.d_pad,
            compute_dtype=self.compute_dtype))


if __name__ == "__main__":
    key = jax.random.PRNGKey(0)
    k_x, k_w = jax.random.split(key)

    B, D = 8, 32                 # batch, output_dim (feature dim of x)
    nmb_prototypes = [16, 32]    # two prototype heads

    x = jax.random.normal(k_x, (B, D), dtype=jnp.float32)
    module = MultiPrototypes(D, nmb_prototypes, k_w)

    outs = [jax.block_until_ready(o) for o in module(x)]

    # Tight check vs a reference using the same bf16 input rounding (f32
    # accumulation), plus a loose sanity check vs exact f32 math.
    xq = x.astype(module.compute_dtype).astype(jnp.float32)
    for o, w, k_heads in zip(outs, module.weights, nmb_prototypes):
        assert o.shape == (B, k_heads), (o.shape, (B, k_heads))
        assert o.dtype == jnp.float32
        wq = w.astype(module.compute_dtype).astype(jnp.float32)
        ref_q = xq @ wq.T
        ref_f32 = x @ w.T
        assert jnp.allclose(o, ref_q, atol=1e-3, rtol=1e-3), \
            "mismatch vs bf16-rounded reference"
        assert jnp.allclose(o, ref_f32, atol=1e-1, rtol=1e-1), \
            "mismatch vs f32 reference"

    print("KERNEL_OK")
</pallas_src>

<mosaic_0001>
module attributes {stable_mosaic.version = 11 : i64} {
  func.func @_mm_kernel_single_k(%arg0: i32, %arg1: i32, %arg2: memref<8x128xbf16, #tpu.memory_space<vmem>>, %arg3: memref<128x16xbf16, #tpu.memory_space<vmem>>, %arg4: memref<8x16xf32, #tpu.memory_space<vmem>>) attributes {dimension_semantics = [#tpu.dimension_semantics<parallel>, #tpu.dimension_semantics<parallel>], iteration_bounds = array<i64: 1, 1>, scalar_prefetch = 0 : i64, scratch_operands = 0 : i64, tpu.core_type = #tpu.core_type<tc>, window_params = [{transform_indices = @transform_0, window_bounds = array<i64: 8, 128>}, {transform_indices = @transform_1, window_bounds = array<i64: 128, 16>}, {transform_indices = @transform_2, window_bounds = array<i64: 8, 16>}]} {
    %c0 = arith.constant 0 : index
    %c0_0 = arith.constant 0 : index
    %0 = vector.load %arg2[%c0, %c0_0] : memref<8x128xbf16, #tpu.memory_space<vmem>>, vector<8x128xbf16>
    %c0_1 = arith.constant 0 : index
    %c0_2 = arith.constant 0 : index
    %1 = vector.load %arg3[%c0_1, %c0_2] : memref<128x16xbf16, #tpu.memory_space<vmem>>, vector<128x16xbf16>
    %cst = arith.constant dense<0.000000e+00> : vector<8x16xf32>
    %2 = tpu.matmul %0, %1, %cst {dimension_numbers = #tpu.dot_dimension_numbers<[1], [0], [0], [1], [0, 0, 1, 1], [], []>} : vector<8x128xbf16>, vector<128x16xbf16>, vector<8x16xf32> -> vector<8x16xf32>
    %c0_3 = arith.constant 0 : index
    %c0_4 = arith.constant 0 : index
    %3 = vector.load %arg4[%c0_3, %c0_4] : memref<8x16xf32, #tpu.memory_space<vmem>>, vector<8x16xf32>
    tpu.vector_store %arg4[%c0_3, %c0_4], %2 {strides = array<i32>} : memref<8x16xf32, #tpu.memory_space<vmem>>, vector<8x16xf32>,
    return
  }
  func.func @transform_0(%arg0: i32, %arg1: i32) -> (i32, i32) {
    %c0_i32 = arith.constant 0 : i32
    %c0_i32_0 = arith.constant 0 : i32
    return %arg0, %c0_i32 : i32, i32
  }
  func.func @transform_1(%arg0: i32, %arg1: i32) -> (i32, i32) {
    %c0_i32 = arith.constant 0 : i32
    %c0_i32_0 = arith.constant 0 : i32
    return %c0_i32, %arg1 : i32, i32
  }
  func.func @transform_2(%arg0: i32, %arg1: i32) -> (i32, i32) {
    %c0_i32 = arith.constant 0 : i32
    return %arg0, %arg1 : i32, i32
  }
}

module attributes {stable_mosaic.version = 11 : i64} {
  func.func @_mm_kernel_single_k(%arg0: i32, %arg1: i32, %arg2: memref<8x128xbf16, #tpu.memory_space<vmem>>, %arg3: memref<128x32xbf16, #tpu.memory_space<vmem>>, %arg4: memref<8x32xf32, #tpu.memory_space<vmem>>) attributes {dimension_semantics = [#tpu.dimension_semantics<parallel>, #tpu.dimension_semantics<parallel>], iteration_bounds = array<i64: 1, 1>, scalar_prefetch = 0 : i64, scratch_operands = 0 : i64, tpu.core_type = #tpu.core_type<tc>, window_params = [{transform_indices = @transform_0, window_bounds = array<i64: 8, 128>}, {transform_indices = @transform_1, window_bounds = array<i64: 128, 32>}, {transform_indices = @transform_2, window_bounds = array<i64: 8, 32>}]} {
    %c0 = arith.constant 0 : index
    %c0_0 = arith.constant 0 : index
    %0 = vector.load %arg2[%c0, %c0_0] : memref<8x128xbf16, #tpu.memory_space<vmem>>, vector<8x128xbf16>
    %c0_1 = arith.constant 0 : index
    %c0_2 = arith.constant 0 : index
    %1 = vector.load %arg3[%c0_1, %c0_2] : memref<128x32xbf16, #tpu.memory_space<vmem>>, vector<128x32xbf16>
    %cst = arith.constant dense<0.000000e+00> : vector<8x32xf32>
    %2 = tpu.matmul %0, %1, %cst {dimension_numbers = #tpu.dot_dimension_numbers<[1], [0], [0], [1], [0, 0, 1, 1], [], []>} : vector<8x128xbf16>, vector<128x32xbf16>, vector<8x32xf32> -> vector<8x32xf32>
    %c0_3 = arith.constant 0 : index
    %c0_4 = arith.constant 0 : index
    %3 = vector.load %arg4[%c0_3, %c0_4] : memref<8x32xf32, #tpu.memory_space<vmem>>, vector<8x32xf32>
    tpu.vector_store %arg4[%c0_3, %c0_4], %2 {strides = array<i32>} : memref<8x32xf32, #tpu.memory_space<vmem>>, vector<8x32xf32>,
    return
  }
  func.func @transform_0(%arg0: i32, %arg1: i32) -> (i32, i32) {
    %c0_i32 = arith.constant 0 : i32
    %c0_i32_0 = arith.constant 0 : i32
    return %arg0, %c0_i32 : i32, i32
  }
  func.func @transform_1(%arg0: i32, %arg1: i32) -> (i32, i32) {
    %c0_i32 = arith.constant 0 : i32
    %c0_i32_0 = arith.constant 0 : i32
    return %c0_i32, %arg1 : i32, i32
  }
  func.func @transform_2(%arg0: i32, %arg1: i32) -> (i32, i32) {
    %c0_i32 = arith.constant 0 : i32
    return %arg0, %arg1 : i32, i32
  }
}

</mosaic_0001>

<llo_original>
// kernel: _multi_proto_forward.3
$region0: #{_multi_proto_forward.3}
  #allocation0 [shape = 'u32[]', space=smem, size = 0x4, offset = 0x4, fixed_abs, tag = 'smem constant byte address 0x4 - core index']
  #allocation1 [shape = 'u32[72,128]{1,0:T(1,128)}', space=vmem, size = 0x9000, scoped, tag = 'internal scratch']
  %s0 = inlined_call_operand.vmem [shape: bf16[8,128], index: 0, kind: input, shape index: {}]
  %s1 = inlined_call_operand.vmem [shape: bf16[128,32], index: 1, kind: input, shape index: {}]
  %s2 = inlined_call_operand.hbm [shape: f32[8,32], index: 2, kind: output, shape index: {}]
  %s3 = sld [smem:[#allocation0]]
  $region18: #{_multi_proto_forward.3} parent=0
    _
  %s5 = ssub.s32 1, %s3
  %s6 = scalar_select 0, %s5, %s3
  $region1: #{_multi_proto_forward.3} parent=0
    #allocation2 [shape = 'u8[4096]{0}', space=vmem, size = 0x1000, scoped, tag = 'output window, operand 0, single buffered']
    #allocation3 [shape = 's32[1]{0}', space=sflag, size = 0x4, scoped, tag = 'scoped memory for _multi_proto_forward.3']
    %7 = vsyncpa [#allocation3], 0
    // Predicated region
    $region2: #{_multi_proto_forward.3} parent=1 // pred_check
      _
    $region3: #{_multi_proto_forward.3} parent=1 // pred_check_branch
      %9 = sbr.rel (0) target = $region5
    $region4: #{_multi_proto_forward.3} parent=1 // pred_region
      _
    $region5: #{_multi_proto_forward.3} parent=1 // pred_fallthru
      _
    // Predicated region
    $region6: #{_multi_proto_forward.3} parent=1 // pred_check
      _
    $region7: #{_multi_proto_forward.3} parent=1 // pred_check_branch
      %11 = sbr.rel (0) target = $region9
    $region8: #{_multi_proto_forward.3} parent=1 // pred_region
      _
    $region9: #{_multi_proto_forward.3} parent=1 // pred_fallthru
      _
    %v12 = vld [vmem:[%s0] sm:$0xf]
    %v13 = vld [vmem:[%s1] sm:$0xf]
    %v14 = vld [vmem:[%s1 + $0x4] sm:$0xf]
    %v15 = vld [vmem:[%s1 + $0x8] sm:$0xf]
    %v16 = vld [vmem:[%s1 + $0xc] sm:$0xf]
    %v17 = vld [vmem:[%s1 + $0x10] sm:$0xf]
    %v18 = vld [vmem:[%s1 + $0x14] sm:$0xf]
    %v19 = vld [vmem:[%s1 + $0x18] sm:$0xf]
    %v20 = vld [vmem:[%s1 + $0x1c] sm:$0xf]
    %v21 = vld [vmem:[%s1 + $0x20] sm:$0xf]
    %v22 = vld [vmem:[%s1 + $0x24] sm:$0xf]
    %v23 = vld [vmem:[%s1 + $0x28] sm:$0xf]
    %v24 = vld [vmem:[%s1 + $0x2c] sm:$0xf]
    %v25 = vld [vmem:[%s1 + $0x30] sm:$0xf]
    %v26 = vld [vmem:[%s1 + $0x34] sm:$0xf]
    %v27 = vld [vmem:[%s1 + $0x38] sm:$0xf]
    %v28 = vld [vmem:[%s1 + $0x3c] sm:$0xf]
    %v45 = vunpack.c.l.b16 %v13
    %v46 = vunpack.c.l.b16 %v14
    %v47 = vunpack.c.l.b16 %v15
    %v48 = vunpack.c.l.b16 %v16
    %v49 = vunpack.c.l.b16 %v17
    %v50 = vunpack.c.l.b16 %v18
    %v51 = vunpack.c.l.b16 %v19
    %v52 = vunpack.c.l.b16 %v20
    %v53 = vunpack.c.l.b16 %v21
    %v54 = vunpack.c.l.b16 %v22
    %v55 = vunpack.c.l.b16 %v23
    %v56 = vunpack.c.l.b16 %v24
    %v57 = vunpack.c.l.b16 %v25
    %v58 = vunpack.c.l.b16 %v26
    %v59 = vunpack.c.l.b16 %v27
    %v60 = vunpack.c.l.b16 %v28
    %v61 = vpack.c.b16 %v46, %v45
    %v62 = vpack.c.b16 %v48, %v47
    %v63 = vpack.c.b16 %v50, %v49
    %v64 = vpack.c.b16 %v52, %v51
    %v65 = vpack.c.b16 %v54, %v53
    %v66 = vpack.c.b16 %v56, %v55
    %v67 = vpack.c.b16 %v58, %v57
    %v68 = vpack.c.b16 %v60, %v59
    %77 = vmatpush.bf16.msra.mxu0 %v68
    %78 = vmatpush.bf16.msra.mxu0 %v67
    %79 = vmatpush.bf16.msra.mxu0 %v66
    %80 = vmatpush.bf16.msra.mxu0 %v65
    %81 = vmatpush.bf16.msra.mxu0 %v64
    %82 = vmatpush.bf16.msra.mxu0 %v63
    %83 = vmatpush.bf16.msra.mxu0 %v62
    %84 = vmatpush.bf16.msra.mxu0 %v61
    %85 = vmatmul.bf16.gmra.mxu0 %v12
    %v86 = vpop.f32.mrf.mxu0
    %v87 = vadd.f32 0.0, %v86
    %v88 = vpop.f32.mrf.mxu0
    %89 = vdwg.mxu0
    %vm90 = vcmask 261120
    %91 = vst.msk [vmem:[#allocation2] sm:$0xff] %vm90, %v87
    // Predicated region
    $region10: #{_multi_proto_forward.3} parent=1 // pred_check
      _
    $region11: #{_multi_proto_forward.3} parent=1 // pred_check_branch
      %93 = sbr.rel (0) target = $region13
    $region12: #{_multi_proto_forward.3} parent=1 // pred_region
      %95 = vsyncadd [#allocation3], 0
      %s97 = sshll.u32 [#allocation2], 4
      %s98 = int_to_ptr.vmem [resolvable:$true] %s97
      %s99 = sshll.u32 %s2, 4
      %s100 = int_to_ptr.hbm [resolvable:$true] %s99
      %102 = dma.vmem_to_hbm [thread:$0]  %s98, 128, %s100, [#allocation3]
    $region13: #{_multi_proto_forward.3} parent=1 // pred_fallthru
      _
    // Predicated region
    $region14: #{_multi_proto_forward.3} parent=1 // pred_check
      _
    $region15: #{_multi_proto_forward.3} parent=1 // pred_check_branch
      %104 = sbr.rel (0) target = $region17
    $region16: #{_multi_proto_forward.3} parent=1 // pred_region
      %106 = dma.done [#allocation3], 128
    $region17: #{_multi_proto_forward.3} parent=1 // pred_fallthru
      _
    %107 = vsyncpa [#allocation3], 1

// kernel: _multi_proto_forward.2
$region0: #{_multi_proto_forward.2}
  #allocation0 [shape = 'u32[]', space=smem, size = 0x4, offset = 0x4, fixed_abs, tag = 'smem constant byte address 0x4 - core index']
  #allocation1 [shape = 'u32[72,128]{1,0:T(1,128)}', space=vmem, size = 0x9000, scoped, tag = 'internal scratch']
  %s0 = inlined_call_operand.vmem [shape: bf16[8,128], index: 0, kind: input, shape index: {}]
  %s1 = inlined_call_operand.vmem [shape: bf16[128,16], index: 1, kind: input, shape index: {}]
  %s2 = inlined_call_operand.hbm [shape: f32[8,16], index: 2, kind: output, shape index: {}]
  %s3 = sld [smem:[#allocation0]]
  $region18: #{_multi_proto_forward.2} parent=0
    _
  %s5 = ssub.s32 1, %s3
  %s6 = scalar_select 0, %s5, %s3
  $region1: #{_multi_proto_forward.2} parent=0
    #allocation2 [shape = 'u8[4096]{0}', space=vmem, size = 0x1000, scoped, tag = 'output window, operand 0, single buffered']
    #allocation3 [shape = 's32[1]{0}', space=sflag, size = 0x4, scoped, tag = 'scoped memory for _multi_proto_forward.2']
    %7 = vsyncpa [#allocation3], 0
    // Predicated region
    $region2: #{_multi_proto_forward.2} parent=1 // pred_check
      _
    $region3: #{_multi_proto_forward.2} parent=1 // pred_check_branch
      %9 = sbr.rel (0) target = $region5
    $region4: #{_multi_proto_forward.2} parent=1 // pred_region
      _
    $region5: #{_multi_proto_forward.2} parent=1 // pred_fallthru
      _
    // Predicated region
    $region6: #{_multi_proto_forward.2} parent=1 // pred_check
      _
    $region7: #{_multi_proto_forward.2} parent=1 // pred_check_branch
      %11 = sbr.rel (0) target = $region9
    $region8: #{_multi_proto_forward.2} parent=1 // pred_region
      _
    $region9: #{_multi_proto_forward.2} parent=1 // pred_fallthru
      _
    %v12 = vld [vmem:[%s0] sm:$0xf]
    %v13 = vld [vmem:[%s1] sm:$0xf]
    %v14 = vld [vmem:[%s1 + $0x4] sm:$0xf]
    %v15 = vld [vmem:[%s1 + $0x8] sm:$0xf]
    %v16 = vld [vmem:[%s1 + $0xc] sm:$0xf]
    %v17 = vld [vmem:[%s1 + $0x10] sm:$0xf]
    %v18 = vld [vmem:[%s1 + $0x14] sm:$0xf]
    %v19 = vld [vmem:[%s1 + $0x18] sm:$0xf]
    %v20 = vld [vmem:[%s1 + $0x1c] sm:$0xf]
    %v21 = vld [vmem:[%s1 + $0x20] sm:$0xf]
    %v22 = vld [vmem:[%s1 + $0x24] sm:$0xf]
    %v23 = vld [vmem:[%s1 + $0x28] sm:$0xf]
    %v24 = vld [vmem:[%s1 + $0x2c] sm:$0xf]
    %v25 = vld [vmem:[%s1 + $0x30] sm:$0xf]
    %v26 = vld [vmem:[%s1 + $0x34] sm:$0xf]
    %v27 = vld [vmem:[%s1 + $0x38] sm:$0xf]
    %v28 = vld [vmem:[%s1 + $0x3c] sm:$0xf]
    %v45 = vunpack.c.l.b16 %v13
    %v46 = vunpack.c.l.b16 %v14
    %v47 = vunpack.c.l.b16 %v15
    %v48 = vunpack.c.l.b16 %v16
    %v49 = vunpack.c.l.b16 %v17
    %v50 = vunpack.c.l.b16 %v18
    %v51 = vunpack.c.l.b16 %v19
    %v52 = vunpack.c.l.b16 %v20
    %v53 = vunpack.c.l.b16 %v21
    %v54 = vunpack.c.l.b16 %v22
    %v55 = vunpack.c.l.b16 %v23
    %v56 = vunpack.c.l.b16 %v24
    %v57 = vunpack.c.l.b16 %v25
    %v58 = vunpack.c.l.b16 %v26
    %v59 = vunpack.c.l.b16 %v27
    %v60 = vunpack.c.l.b16 %v28
    %v61 = vpack.c.b16 %v46, %v45
    %v62 = vpack.c.b16 %v48, %v47
    %v63 = vpack.c.b16 %v50, %v49
    %v64 = vpack.c.b16 %v52, %v51
    %v65 = vpack.c.b16 %v54, %v53
    %v66 = vpack.c.b16 %v56, %v55
    %v67 = vpack.c.b16 %v58, %v57
    %v68 = vpack.c.b16 %v60, %v59
    %77 = vmatpush.bf16.msra.mxu0 %v68
    %78 = vmatpush.bf16.msra.mxu0 %v67
    %79 = vmatpush.bf16.msra.mxu0 %v66
    %80 = vmatpush.bf16.msra.mxu0 %v65
    %81 = vmatpush.bf16.msra.mxu0 %v64
    %82 = vmatpush.bf16.msra.mxu0 %v63
    %83 = vmatpush.bf16.msra.mxu0 %v62
    %84 = vmatpush.bf16.msra.mxu0 %v61
    %85 = vmatmul.bf16.gmra.mxu0 %v12
    %v86 = vpop.f32.mrf.mxu0
    %v87 = vadd.f32 0.0, %v86
    %v88 = vpop.f32.mrf.mxu0
    %89 = vdwg.mxu0
    %vm90 = vcmask 130048
    %91 = vst.msk [vmem:[#allocation2] sm:$0xff] %vm90, %v87
    // Predicated region
    $region10: #{_multi_proto_forward.2} parent=1 // pred_check
      _
    $region11: #{_multi_proto_forward.2} parent=1 // pred_check_branch
      %93 = sbr.rel (0) target = $region13
    $region12: #{_multi_proto_forward.2} parent=1 // pred_region
      %95 = vsyncadd [#allocation3], 0
      %s97 = sshll.u32 [#allocation2], 4
      %s98 = int_to_ptr.vmem [resolvable:$true] %s97
      %s99 = sshll.u32 %s2, 4
      %s100 = int_to_ptr.hbm [resolvable:$true] %s99
      %102 = dma.vmem_to_hbm [thread:$0]  %s98, 128, %s100, [#allocation3]
    $region13: #{_multi_proto_forward.2} parent=1 // pred_fallthru
      _
    // Predicated region
    $region14: #{_multi_proto_forward.2} parent=1 // pred_check
      _
    $region15: #{_multi_proto_forward.2} parent=1 // pred_check_branch
      %104 = sbr.rel (0) target = $region17
    $region16: #{_multi_proto_forward.2} parent=1 // pred_region
      %106 = dma.done [#allocation3], 128
    $region17: #{_multi_proto_forward.2} parent=1 // pred_fallthru
      _
    %107 = vsyncpa [#allocation3], 1

</llo_original>
